<compile_context>
chip_gen: v6e
topology: v6e:2x2x1
jax: 0.10.0
libtpu: 0.0.40
codegen_flags: <defaults>
</compile_context>

<pallas_src>
import jax
import jax.numpy as jnp
from jax.experimental import pallas as pl
from jax.experimental.pallas import tpu as pltpu


def _round_up(a, b):
    return (a + b - 1) // b * b


def forecaster_kernel(x_ref, w_ref, b_ref, o_ref):
    # x_ref: (TM, L)  bf16   row-chunk of the flattened (B*C, L) input
    # w_ref: (L, Pp)  bf16   time-projection weight, transposed & lane-padded
    # b_ref: (1, Pp)  f32    bias as a lane vector (broadcast over sublanes)
    # o_ref: (TM, Pp) f32    lane-dense output chunk
    y = jnp.dot(x_ref[...], w_ref[...], preferred_element_type=jnp.float32)
    o_ref[...] = y + b_ref[...]


def wrapper_forward(params, batch_x, batch_x_mark, batch_y, batch_y_mark):
    """Equivalent of Wrapper.forward: delegates to the (linear) forecaster.

    batch_x_mark / batch_y / batch_y_mark are unused by this forecaster
    (same as DLinear-style models), kept for signature parity.
    """
    del batch_x_mark, batch_y, batch_y_mark  # glue-level pass-through, unused
    W, bias = params["W"], params["bias"]          # (P, L), (P, 1)
    B, L, C = batch_x.shape
    P = W.shape[0]

    # ---- layout restructure (outside the kernel) ----
    # (B, L, C) -> (B, C, L) -> (B*C, L): channels fold into the GEMM M axis,
    # pred_len becomes the lane (N) axis.
    M = B * C
    x_flat = jnp.transpose(batch_x, (0, 2, 1)).reshape(M, L)

    TM = min(512, _round_up(M, 8))          # row-chunk size (multiple of 8)
    M_pad = _round_up(M, TM)
    Pp = _round_up(P, 128)                  # lane-dense, unmasked stores

    # bf16 inputs to the MXU (HBM traffic halved); f32 accumulate inside kernel.
    x_pad = jnp.zeros((M_pad, L), jnp.bfloat16).at[:M, :].set(
        x_flat.astype(jnp.bfloat16))
    w_pad = jnp.zeros((L, Pp), jnp.bfloat16).at[:, :P].set(
        W.T.astype(jnp.bfloat16))
    b_pad = jnp.zeros((1, Pp), jnp.float32).at[0, :P].set(
        bias.reshape(P).astype(jnp.float32))

    grid = (M_pad // TM,)
    cost = pl.CostEstimate(
        flops=2 * M * L * P,
        transcendentals=0,
        bytes_accessed=M * L * 2 + L * P * 2 + P * 4 + M * P * 4,
    )

    out_flat = pl.pallas_call(
        forecaster_kernel,
        out_shape=jax.ShapeDtypeStruct((M_pad, Pp), jnp.float32),
        grid_spec=pltpu.PrefetchScalarGridSpec(
            num_scalar_prefetch=0,
            grid=grid,
            in_specs=[
                pl.BlockSpec((TM, L), lambda i: (i, 0)),   # x row chunk
                pl.BlockSpec((L, Pp), lambda i: (0, 0)),   # W (shared, resident)
                pl.BlockSpec((1, Pp), lambda i: (0, 0)),   # bias lane vector
            ],
            out_specs=pl.BlockSpec((TM, Pp), lambda i: (i, 0)),
        ),
        compiler_params=pltpu.CompilerParams(
            # Parallel row-chunk axis: shards across v7x's 2 TensorCores,
            # no-op on v5e/v6e.  Default Buffered(2) pipelining is kept.
            dimension_semantics=("parallel",)),
        cost_estimate=cost,
    )(x_pad, w_pad, b_pad)

    # Strip padding and restore (B, P, C).
    out = out_flat[:M, :P].reshape(B, C, P)
    return jnp.transpose(out, (0, 2, 1))


def init_params(key, seq_len, pred_len):
    kw, kb = jax.random.split(key)
    W = jax.random.normal(kw, (pred_len, seq_len), jnp.float32) / jnp.sqrt(seq_len)
    bias = jax.random.normal(kb, (pred_len, 1), jnp.float32) * 0.01
    return {"W": W, "bias": bias}


if __name__ == "__main__":
    # Small, forward-consistent shapes: batch=2, seq_len=8, pred_len=8,
    # channels=4, 4 time-mark features.
    B, L, P, C, Mk = 2, 8, 8, 4, 4
    key = jax.random.PRNGKey(0)
    kp, kx, kxm, ky, kym = jax.random.split(key, 5)

    params = init_params(kp, L, P)
    batch_x = jax.random.normal(kx, (B, L, C), jnp.float32)
    batch_x_mark = jax.random.normal(kxm, (B, L, Mk), jnp.float32)
    batch_y = jax.random.normal(ky, (B, P, C), jnp.float32)
    batch_y_mark = jax.random.normal(kym, (B, P, Mk), jnp.float32)

    out = wrapper_forward(params, batch_x, batch_x_mark, batch_y, batch_y_mark)
    out = jax.block_until_ready(out)

    # Pure-JAX reference of the forecaster math with matching bf16 input rounding
    # (accumulation in f32, same as the kernel).
    xb = batch_x.astype(jnp.bfloat16).astype(jnp.float32)
    Wb = params["W"].astype(jnp.bfloat16).astype(jnp.float32)
    ref = jnp.einsum("pl,blc->bpc", Wb, xb) + params["bias"][None]

    assert out.shape == (B, P, C)
    assert jnp.allclose(out, ref, atol=1e-3, rtol=1e-3), "mismatch vs reference"

    print("KERNEL_OK")
</pallas_src>

<mosaic_0001>
module attributes {stable_mosaic.version = 11 : i64} {
  func.func @forecaster_kernel(%arg0: i32, %arg1: memref<8x8xbf16, #tpu.memory_space<vmem>>, %arg2: memref<8x128xbf16, #tpu.memory_space<vmem>>, %arg3: memref<1x128xf32, #tpu.memory_space<vmem>>, %arg4: memref<8x128xf32, #tpu.memory_space<vmem>>) attributes {dimension_semantics = [#tpu.dimension_semantics<parallel>], iteration_bounds = array<i64: 1>, scalar_prefetch = 0 : i64, scratch_operands = 0 : i64, tpu.core_type = #tpu.core_type<tc>, window_params = [{transform_indices = @transform_0, window_bounds = array<i64: 8, 8>}, {pipeline_mode = #tpu.pipeline_mode<synchronous>, transform_indices = @transform_1, window_bounds = array<i64: 8, 128>}, {pipeline_mode = #tpu.pipeline_mode<synchronous>, transform_indices = @transform_2, window_bounds = array<i64: 1, 128>}, {transform_indices = @transform_3, window_bounds = array<i64: 8, 128>}]} {
    %c0 = arith.constant 0 : index
    %c0_0 = arith.constant 0 : index
    %0 = vector.load %arg1[%c0, %c0_0] : memref<8x8xbf16, #tpu.memory_space<vmem>>, vector<8x8xbf16>
    %c0_1 = arith.constant 0 : index
    %c0_2 = arith.constant 0 : index
    %1 = vector.load %arg2[%c0_1, %c0_2] : memref<8x128xbf16, #tpu.memory_space<vmem>>, vector<8x128xbf16>
    %cst = arith.constant dense<0.000000e+00> : vector<8x128xf32>
    %2 = tpu.matmul %0, %1, %cst {dimension_numbers = #tpu.dot_dimension_numbers<[1], [0], [0], [1], [0, 0, 1, 1], [], []>} : vector<8x8xbf16>, vector<8x128xbf16>, vector<8x128xf32> -> vector<8x128xf32>
    %c0_3 = arith.constant 0 : index
    %c0_4 = arith.constant 0 : index
    %3 = vector.load %arg3[%c0_3, %c0_4] : memref<1x128xf32, #tpu.memory_space<vmem>>, vector<1x128xf32>
    %4 = vector.broadcast %3 : vector<1x128xf32> to vector<8x128xf32>
    %5 = arith.addf %2, %4 : vector<8x128xf32>
    %c0_5 = arith.constant 0 : index
    %c0_6 = arith.constant 0 : index
    %6 = vector.load %arg4[%c0_5, %c0_6] : memref<8x128xf32, #tpu.memory_space<vmem>>, vector<8x128xf32>
    tpu.vector_store %arg4[%c0_5, %c0_6], %5 {strides = array<i32>} : memref<8x128xf32, #tpu.memory_space<vmem>>, vector<8x128xf32>,
    return
  }
  func.func @transform_0(%arg0: i32) -> (i32, i32) {
    %c0_i32 = arith.constant 0 : i32
    %c0_i32_0 = arith.constant 0 : i32
    return %arg0, %c0_i32 : i32, i32
  }
  func.func @transform_1(%arg0: i32) -> (i32, i32) {
    %c0_i32 = arith.constant 0 : i32
    %c0_i32_0 = arith.constant 0 : i32
    %c0_i32_1 = arith.constant 0 : i32
    return %c0_i32, %c0_i32_0 : i32, i32
  }
  func.func @transform_2(%arg0: i32) -> (i32, i32) {
    %c0_i32 = arith.constant 0 : i32
    %c0_i32_0 = arith.constant 0 : i32
    %c0_i32_1 = arith.constant 0 : i32
    return %c0_i32, %c0_i32_0 : i32, i32
  }
  func.func @transform_3(%arg0: i32) -> (i32, i32) {
    %c0_i32 = arith.constant 0 : i32
    %c0_i32_0 = arith.constant 0 : i32
    return %arg0, %c0_i32 : i32, i32
  }
}

</mosaic_0001>

<llo_original>
// kernel: tpu_custom_call.1
$region0: #{tpu_custom_call.1}
  #allocation0 [shape = 'u32[]', space=smem, size = 0x4, offset = 0x4, fixed_abs, tag = 'smem constant byte address 0x4 - core index']
  #allocation1 [shape = 'u32[144,128]{1,0:T(1,128)}', space=vmem, size = 0x12000, scoped, tag = 'internal scratch']
  %s0 = inlined_call_operand.hbm [shape: bf16[8,8], index: 0, kind: input, shape index: {}]
  %s1 = inlined_call_operand.hbm [shape: bf16[8,128], index: 1, kind: input, shape index: {}]
  %s2 = inlined_call_operand.vmem [shape: f32[1,128], index: 2, kind: input, shape index: {}]
  %s3 = inlined_call_operand.hbm [shape: f32[8,128], index: 3, kind: output, shape index: {}]
  %s4 = sld [smem:[#allocation0]]
  $region30: #{tpu_custom_call.1} parent=0
    _
  %s6 = ssub.s32 1, %s4
  %s7 = scalar_select 0, %s6, %s4
  $region1: #{tpu_custom_call.1} parent=0
    #allocation2 [shape = 'u8[2048]{0}', space=vmem, size = 0x800, scoped, tag = 'input window, operand 0, single buffered']
    #allocation3 [shape = 's32[1]{0}', space=sflag, size = 0x4, scoped, tag = 'scoped memory for tpu_custom_call.1']
    #allocation4 [shape = 's32[1]{0}', space=sflag, size = 0x4, scoped, tag = 'scoped memory for tpu_custom_call.1']
    #allocation5 [shape = 'u8[2048]{0}', space=vmem, size = 0x800, scoped, tag = 'input window, operand 1, single buffered']
    #allocation6 [shape = 's32[1]{0}', space=sflag, size = 0x4, scoped, tag = 'scoped memory for tpu_custom_call.1']
    #allocation7 [shape = 'u8[4096]{0}', space=vmem, size = 0x1000, scoped, tag = 'output window, operand 0, single buffered']
    %8 = vsyncpa [#allocation3], 0
    %9 = vsyncpa [#allocation6], 0
    %10 = vsyncpa [#allocation4], 0
    // Predicated region
    $region2: #{tpu_custom_call.1} parent=1 // pred_check
      _
    $region3: #{tpu_custom_call.1} parent=1 // pred_check_branch
      %12 = sbr.rel (0) target = $region5
    $region4: #{tpu_custom_call.1} parent=1 // pred_region
      %s14 = ssub.s32 64, 64
      %15 = vsyncadd [#allocation3], %s14
      %s17 = sshll.u32 [#allocation2], 4
      %s18 = int_to_ptr.vmem [resolvable:$true] %s17
      %20 = dma.hbm_to_vmem [thread:$0]  %s0, 64, %s18, [#allocation3]
    $region5: #{tpu_custom_call.1} parent=1 // pred_fallthru
      _
    // Predicated region
    $region6: #{tpu_custom_call.1} parent=1 // pred_check
      _
    $region7: #{tpu_custom_call.1} parent=1 // pred_check_branch
      %22 = sbr.rel (0) target = $region9
    $region8: #{tpu_custom_call.1} parent=1 // pred_region
      %s24 = ssub.s32 64, 64
      %25 = vsyncadd [#allocation6], %s24
      %s27 = sshll.u32 [#allocation5], 4
      %s28 = int_to_ptr.vmem [resolvable:$true] %s27
      %30 = dma.hbm_to_vmem [thread:$0]  %s1, 64, %s28, [#allocation6]
    $region9: #{tpu_custom_call.1} parent=1 // pred_fallthru
      _
    // Predicated region
    $region10: #{tpu_custom_call.1} parent=1 // pred_check
      _
    $region11: #{tpu_custom_call.1} parent=1 // pred_check_branch
      %32 = sbr.rel (0) target = $region13
    $region12: #{tpu_custom_call.1} parent=1 // pred_region
      _
    $region13: #{tpu_custom_call.1} parent=1 // pred_fallthru
      _
    // Predicated region
    $region14: #{tpu_custom_call.1} parent=1 // pred_check
      _
    $region15: #{tpu_custom_call.1} parent=1 // pred_check_branch
      %34 = sbr.rel (0) target = $region17
    $region16: #{tpu_custom_call.1} parent=1 // pred_region
      %35 = dma.done [#allocation3], 64
    $region17: #{tpu_custom_call.1} parent=1 // pred_fallthru
      _
    // Predicated region
    $region18: #{tpu_custom_call.1} parent=1 // pred_check
      _
    $region19: #{tpu_custom_call.1} parent=1 // pred_check_branch
      %37 = sbr.rel (0) target = $region21
    $region20: #{tpu_custom_call.1} parent=1 // pred_region
      %38 = dma.done [#allocation6], 64
    $region21: #{tpu_custom_call.1} parent=1 // pred_fallthru
      _
    %v40 = vld [vmem:[#allocation2] sm:$0xf]
    %v41 = vld [vmem:[#allocation5] sm:$0xf]
    %v42 = vld [vmem:[%s2] sm:$0x1]
    %v44 = vlaneseq
    %v45 = vshrl.u32 %v44, 7
    %v46 = vsub.s32 0, %v45
    %v47 = vrot.slane %v42, %v46
    %vm49 = vcmask 64512
    %v51 = vsel %vm49, %v40, 0
    %vm53 = vcmask 1043456
    %v55 = vsel %vm53, %v41, 0
    %57 = vmatprep.subr.bf16.mxu0 0
    %58 = vmatpush1.bf16.msra.mxu0 0
    %59 = vmatprep.subr.bf16.mxu0 0
    %60 = vmatpush1.bf16.msra.mxu0 0
    %61 = vmatprep.subr.bf16.mxu0 0
    %62 = vmatpush1.bf16.msra.mxu0 0
    %63 = vmatprep.subr.bf16.mxu0 0
    %64 = vmatpush1.bf16.msra.mxu0 0
    %65 = vmatprep.subr.bf16.mxu0 0
    %66 = vmatpush1.bf16.msra.mxu0 0
    %67 = vmatprep.subr.bf16.mxu0 0
    %68 = vmatpush1.bf16.msra.mxu0 0
    %69 = vmatprep.subr.bf16.mxu0 0
    %70 = vmatpush1.bf16.msra.mxu0 0
    %71 = vmatprep.subr.bf16.mxu0 0
    %72 = vmatpush1.bf16.msra.mxu0 %v55
    %73 = vmatprep.subr.bf16.mxu0 0
    %74 = vmatpush2.bf16.msra.mxu0 0
    %75 = vmatprep.subr.bf16.mxu0 0
    %76 = vmatpush2.bf16.msra.mxu0 0
    %77 = vmatprep.subr.bf16.mxu0 0
    %78 = vmatpush2.bf16.msra.mxu0 0
    %79 = vmatprep.subr.bf16.mxu0 0
    %80 = vmatpush2.bf16.msra.mxu0 0
    %81 = vmatprep.subr.bf16.mxu0 0
    %82 = vmatpush2.bf16.msra.mxu0 0
    %83 = vmatprep.subr.bf16.mxu0 0
    %84 = vmatpush2.bf16.msra.mxu0 0
    %85 = vmatprep.subr.bf16.mxu0 0
    %86 = vmatpush2.bf16.msra.mxu0 0
    %87 = vmatprep.subr.bf16.mxu0 0
    %88 = vmatpush2.bf16.msra.mxu0 0
    %89 = vmatprep.mubr.bf16.mxu0 0
    %90 = vmatmul.mubr.bf16.gmra.mxu0 %v51
    %v91 = vpop.f32.mrf.mxu0
    %v92 = vadd.f32 %v47, %v91
    %v93 = vpop.f32.mrf.mxu0
    %v94 = vpop.f32.mrf.mxu0
    %v95 = vpop.f32.mrf.mxu0
    %96 = vdwg.mxu0
    %97 = vst [vmem:[#allocation7] sm:$0xff] %v92
    // Predicated region
    $region22: #{tpu_custom_call.1} parent=1 // pred_check
      _
    $region23: #{tpu_custom_call.1} parent=1 // pred_check_branch
      %99 = sbr.rel (0) target = $region25
    $region24: #{tpu_custom_call.1} parent=1 // pred_region
      %s101 = ssub.s32 128, 128
      %102 = vsyncadd [#allocation4], %s101
      %s104 = sshll.u32 [#allocation7], 4
      %s105 = int_to_ptr.vmem [resolvable:$true] %s104
      %107 = dma.vmem_to_hbm [thread:$0]  %s105, 128, %s3, [#allocation4]
    $region25: #{tpu_custom_call.1} parent=1 // pred_fallthru
      _
    // Predicated region
    $region26: #{tpu_custom_call.1} parent=1 // pred_check
      _
    $region27: #{tpu_custom_call.1} parent=1 // pred_check_branch
      %109 = sbr.rel (0) target = $region29
    $region28: #{tpu_custom_call.1} parent=1 // pred_region
      %110 = dma.done [#allocation4], 128
    $region29: #{tpu_custom_call.1} parent=1 // pred_fallthru
      _
    %111 = vsyncpa [#allocation3], 1
    %112 = vsyncpa [#allocation6], 1
    %113 = vsyncpa [#allocation4], 1

</llo_original>
